<compile_context>
chip_gen: v6e
topology: v6e:2x2x1
jax: 0.10.0
libtpu: 0.0.40
codegen_flags: <defaults>
</compile_context>

<pallas_src>
import jax
import jax.numpy as jnp
from jax.experimental import pallas as pl
from jax.experimental.pallas import tpu as pltpu


LANE = 128
SUBLANE = 8
SPLIT_M = 256      # above this many rows, use >=2 grid steps (v7x dual-TC)
MAX_TILE_M = 2048  # rows per grid step cap (bf16 x keeps this inside VMEM budgets)


def _round_up(v, m):
    return (v + m - 1) // m * m


# ---------------------------------------------------------------------------
# Fused kernel: out = relu(x @ W1 + b1) @ W2 + b2   (all tiles VMEM-resident)
#   x_ref : (tm, 784) bf16      w1_ref: (784, 128) bf16   b1_ref: (1, 128) f32
#   w2_ref: (128, 128) bf16     b2_ref: (1, 128) f32      o_ref : (tm, 128) bf16
# ---------------------------------------------------------------------------
def _fcn_kernel(x_ref, w1_ref, b1_ref, w2_ref, b2_ref, o_ref):
    h = jnp.dot(x_ref[...], w1_ref[...], preferred_element_type=jnp.float32)
    h = jnp.maximum(h + b1_ref[...], 0.0)
    y = jnp.dot(h.astype(jnp.bfloat16), w2_ref[...],
                preferred_element_type=jnp.float32)
    o_ref[...] = (y + b2_ref[...]).astype(o_ref.dtype)


# ---------------------------------------------------------------------------
# One-time parameter prep: transpose + pad hidden/class dims to 128 lanes,
# pre-cast weights to bf16 (biases stay f32, added to the f32 accumulator).
# ---------------------------------------------------------------------------
def prepare_params(fw1, fb1, fw2, fb2):
    h, k = fw1.shape                 # (32, 784) torch Linear layout [out, in]
    c, h2 = fw2.shape                # (num_classes, 32)
    assert h == h2
    hp = _round_up(h, LANE)          # 32 -> 128
    cp = _round_up(c, LANE)          # 10 -> 128
    w1 = jnp.zeros((k, hp), jnp.bfloat16).at[:, :h].set(fw1.T.astype(jnp.bfloat16))
    b1 = jnp.zeros((1, hp), jnp.float32).at[0, :h].set(fb1.astype(jnp.float32))
    w2 = jnp.zeros((hp, cp), jnp.bfloat16).at[:h, :c].set(fw2.T.astype(jnp.bfloat16))
    b2 = jnp.zeros((1, cp), jnp.float32).at[0, :c].set(fb2.astype(jnp.float32))
    return {"w1": w1, "b1": b1, "w2": w2, "b2": b2,
            "in_features": k, "num_classes": c, "hp": hp, "cp": cp}


# ---------------------------------------------------------------------------
# Forward wrapper (quant/dequant are identity in float eval mode)
# ---------------------------------------------------------------------------
def activity_fcn_forward(params, x):
    B = x.shape[0]
    k = params["in_features"]
    hp, cp = params["hp"], params["cp"]

    # x.view(x.shape[0], -1); cast the dominant HBM stream to bf16 up front.
    xf = x.reshape(B, -1).astype(jnp.bfloat16)
    assert xf.shape[1] == k, xf.shape

    if B <= SPLIT_M:
        # Single grid step; block == full array dims (always a legal block).
        tm = B
    else:
        # >=2 grid steps so v7x's second TensorCore gets work; big tiles
        # amortize the ~0.35us/step overhead. Edge block is masked by Pallas.
        tm = min(MAX_TILE_M, _round_up(pl.cdiv(B, 2), SUBLANE))
    grid = (pl.cdiv(B, tm),)

    out = pl.pallas_call(
        _fcn_kernel,
        out_shape=jax.ShapeDtypeStruct((B, cp), jnp.bfloat16),
        grid=grid,
        in_specs=[
            pl.BlockSpec((tm, k), lambda i: (i, 0)),    # x rows tiled over grid
            pl.BlockSpec((k, hp), lambda i: (0, 0)),    # W1 resident (bf16)
            pl.BlockSpec((1, hp), lambda i: (0, 0)),    # b1 (f32)
            pl.BlockSpec((hp, cp), lambda i: (0, 0)),   # W2 resident (bf16)
            pl.BlockSpec((1, cp), lambda i: (0, 0)),    # b2 (f32)
        ],
        out_specs=pl.BlockSpec((tm, cp), lambda i: (i, 0)),
        compiler_params=pltpu.CompilerParams(
            dimension_semantics=("parallel",)),
    )(xf, params["w1"], params["b1"], params["w2"], params["b2"])

    return out[:, :params["num_classes"]].astype(jnp.float32)


# ---------------------------------------------------------------------------
# References for in-script correctness checks
# ---------------------------------------------------------------------------
def reference_forward_bf16(fw1, fb1, fw2, fb2, x):
    """Exactly the arithmetic the kernel performs (bf16 MXU inputs, f32 accum,
    bf16 output store)."""
    xf = x.reshape(x.shape[0], -1).astype(jnp.bfloat16)
    h = jnp.dot(xf, fw1.T.astype(jnp.bfloat16),
                preferred_element_type=jnp.float32) + fb1
    h = jnp.maximum(h, 0.0)
    y = jnp.dot(h.astype(jnp.bfloat16), fw2.T.astype(jnp.bfloat16),
                preferred_element_type=jnp.float32) + fb2
    return y.astype(jnp.bfloat16).astype(jnp.float32)


def reference_forward_f32(fw1, fb1, fw2, fb2, x):
    prec = jax.lax.Precision.HIGHEST
    xf = x.reshape(x.shape[0], -1).astype(jnp.float32)
    h = jnp.maximum(jnp.dot(xf, fw1.T, precision=prec) + fb1, 0.0)
    return jnp.dot(h, fw2.T, precision=prec) + fb2


# ---------------------------------------------------------------------------
if __name__ == "__main__":
    key = jax.random.PRNGKey(0)
    k_x, k_w1, k_b1, k_w2, k_b2 = jax.random.split(key, 5)

    B, num_classes = 2, 10
    # The module flattens to 784 features -> MNIST-shaped input [B, 1, 28, 28].
    x = jax.random.uniform(k_x, (B, 1, 28, 28), jnp.float32)

    # torch-style init: xavier_uniform_ weights, small uniform biases.
    bound1 = (6.0 / (784 + 32)) ** 0.5
    bound2 = (6.0 / (32 + num_classes)) ** 0.5
    fw1 = jax.random.uniform(k_w1, (32, 784), jnp.float32, -bound1, bound1)
    fb1 = jax.random.uniform(k_b1, (32,), jnp.float32, -1.0 / 28.0, 1.0 / 28.0)
    fw2 = jax.random.uniform(k_w2, (num_classes, 32), jnp.float32, -bound2, bound2)
    fb2 = jax.random.uniform(k_b2, (num_classes,), jnp.float32,
                             -1.0 / (32.0 ** 0.5), 1.0 / (32.0 ** 0.5))

    params = prepare_params(fw1, fb1, fw2, fb2)
    out = jax.block_until_ready(activity_fcn_forward(params, x))
    assert out.shape == (B, num_classes), out.shape

    ref_exact = jax.block_until_ready(reference_forward_bf16(fw1, fb1, fw2, fb2, x))
    ref_f32 = jax.block_until_ready(reference_forward_f32(fw1, fb1, fw2, fb2, x))

    if not bool(jnp.allclose(out, ref_exact, atol=1e-2, rtol=1e-2)):
        raise AssertionError(
            "mismatch vs bf16-faithful reference: "
            f"{float(jnp.max(jnp.abs(out - ref_exact)))}")
    if not bool(jnp.allclose(out, ref_f32, atol=5e-2, rtol=5e-2)):
        raise AssertionError(
            "mismatch vs f32 reference: "
            f"{float(jnp.max(jnp.abs(out - ref_f32)))}")
    print("KERNEL_OK")
</pallas_src>

<mosaic_0001>
module attributes {stable_mosaic.version = 11 : i64} {
  func.func @_fcn_kernel(%arg0: i32, %arg1: memref<2x784xbf16, #tpu.memory_space<vmem>>, %arg2: memref<784x128xbf16, #tpu.memory_space<vmem>>, %arg3: memref<1x128xf32, #tpu.memory_space<vmem>>, %arg4: memref<128x128xbf16, #tpu.memory_space<vmem>>, %arg5: memref<1x128xf32, #tpu.memory_space<vmem>>, %arg6: memref<2x128xbf16, #tpu.memory_space<vmem>>) attributes {dimension_semantics = [#tpu.dimension_semantics<parallel>], iteration_bounds = array<i64: 1>, scalar_prefetch = 0 : i64, scratch_operands = 0 : i64, tpu.core_type = #tpu.core_type<tc>, window_params = [{transform_indices = @transform_0, window_bounds = array<i64: 2, 784>}, {pipeline_mode = #tpu.pipeline_mode<synchronous>, transform_indices = @transform_1, window_bounds = array<i64: 784, 128>}, {pipeline_mode = #tpu.pipeline_mode<synchronous>, transform_indices = @transform_2, window_bounds = array<i64: 1, 128>}, {pipeline_mode = #tpu.pipeline_mode<synchronous>, transform_indices = @transform_3, window_bounds = array<i64: 128, 128>}, {pipeline_mode = #tpu.pipeline_mode<synchronous>, transform_indices = @transform_4, window_bounds = array<i64: 1, 128>}, {transform_indices = @transform_5, window_bounds = array<i64: 2, 128>}]} {
    %c0 = arith.constant 0 : index
    %c0_0 = arith.constant 0 : index
    %0 = vector.load %arg1[%c0, %c0_0] : memref<2x784xbf16, #tpu.memory_space<vmem>>, vector<2x784xbf16>
    %c0_1 = arith.constant 0 : index
    %c0_2 = arith.constant 0 : index
    %1 = vector.load %arg2[%c0_1, %c0_2] : memref<784x128xbf16, #tpu.memory_space<vmem>>, vector<784x128xbf16>
    %cst = arith.constant dense<0.000000e+00> : vector<2x128xf32>
    %2 = tpu.matmul %0, %1, %cst {dimension_numbers = #tpu.dot_dimension_numbers<[1], [0], [0], [1], [0, 0, 1, 1], [], []>} : vector<2x784xbf16>, vector<784x128xbf16>, vector<2x128xf32> -> vector<2x128xf32>
    %c0_3 = arith.constant 0 : index
    %c0_4 = arith.constant 0 : index
    %3 = vector.load %arg3[%c0_3, %c0_4] : memref<1x128xf32, #tpu.memory_space<vmem>>, vector<1x128xf32>
    %4 = vector.broadcast %3 : vector<1x128xf32> to vector<2x128xf32>
    %5 = arith.addf %2, %4 : vector<2x128xf32>
    %cst_5 = arith.constant 0.000000e+00 : f32
    %6 = vector.broadcast %cst_5 : f32 to vector<2x128xf32>
    %7 = arith.maximumf %5, %6 : vector<2x128xf32>
    %8 = arith.truncf %7 : vector<2x128xf32> to vector<2x128xbf16>
    %c0_6 = arith.constant 0 : index
    %c0_7 = arith.constant 0 : index
    %9 = vector.load %arg4[%c0_6, %c0_7] : memref<128x128xbf16, #tpu.memory_space<vmem>>, vector<128x128xbf16>
    %cst_8 = arith.constant dense<0.000000e+00> : vector<2x128xf32>
    %10 = tpu.matmul %8, %9, %cst_8 {dimension_numbers = #tpu.dot_dimension_numbers<[1], [0], [0], [1], [0, 0, 1, 1], [], []>} : vector<2x128xbf16>, vector<128x128xbf16>, vector<2x128xf32> -> vector<2x128xf32>
    %c0_9 = arith.constant 0 : index
    %c0_10 = arith.constant 0 : index
    %11 = vector.load %arg5[%c0_9, %c0_10] : memref<1x128xf32, #tpu.memory_space<vmem>>, vector<1x128xf32>
    %12 = vector.broadcast %11 : vector<1x128xf32> to vector<2x128xf32>
    %13 = arith.addf %10, %12 : vector<2x128xf32>
    %14 = arith.truncf %13 : vector<2x128xf32> to vector<2x128xbf16>
    %c0_11 = arith.constant 0 : index
    %c0_12 = arith.constant 0 : index
    %15 = vector.load %arg6[%c0_11, %c0_12] : memref<2x128xbf16, #tpu.memory_space<vmem>>, vector<2x128xbf16>
    tpu.vector_store %arg6[%c0_11, %c0_12], %14 {strides = array<i32>} : memref<2x128xbf16, #tpu.memory_space<vmem>>, vector<2x128xbf16>,
    return
  }
  func.func @transform_0(%arg0: i32) -> (i32, i32) {
    %c0_i32 = arith.constant 0 : i32
    %c0_i32_0 = arith.constant 0 : i32
    return %arg0, %c0_i32 : i32, i32
  }
  func.func @transform_1(%arg0: i32) -> (i32, i32) {
    %c0_i32 = arith.constant 0 : i32
    %c0_i32_0 = arith.constant 0 : i32
    %c0_i32_1 = arith.constant 0 : i32
    return %c0_i32, %c0_i32_0 : i32, i32
  }
  func.func @transform_2(%arg0: i32) -> (i32, i32) {
    %c0_i32 = arith.constant 0 : i32
    %c0_i32_0 = arith.constant 0 : i32
    %c0_i32_1 = arith.constant 0 : i32
    return %c0_i32, %c0_i32_0 : i32, i32
  }
  func.func @transform_3(%arg0: i32) -> (i32, i32) {
    %c0_i32 = arith.constant 0 : i32
    %c0_i32_0 = arith.constant 0 : i32
    %c0_i32_1 = arith.constant 0 : i32
    return %c0_i32, %c0_i32_0 : i32, i32
  }
  func.func @transform_4(%arg0: i32) -> (i32, i32) {
    %c0_i32 = arith.constant 0 : i32
    %c0_i32_0 = arith.constant 0 : i32
    %c0_i32_1 = arith.constant 0 : i32
    return %c0_i32, %c0_i32_0 : i32, i32
  }
  func.func @transform_5(%arg0: i32) -> (i32, i32) {
    %c0_i32 = arith.constant 0 : i32
    %c0_i32_0 = arith.constant 0 : i32
    return %arg0, %c0_i32 : i32, i32
  }
}

</mosaic_0001>

<llo_original>
// kernel: tpu_custom_call.1
$region0: #{tpu_custom_call.1}
  #allocation0 [shape = 'u32[]', space=smem, size = 0x4, offset = 0x4, fixed_abs, tag = 'smem constant byte address 0x4 - core index']
  #allocation1 [shape = 'u32[144,128]{1,0:T(1,128)}', space=vmem, size = 0x12000, scoped, tag = 'internal scratch']
  %s0 = inlined_call_operand.hbm [shape: bf16[2,784], index: 0, kind: input, shape index: {}]
  %s1 = inlined_call_operand.hbm [shape: bf16[784,128], index: 1, kind: input, shape index: {}]
  %s2 = inlined_call_operand.vmem [shape: f32[1,128], index: 2, kind: input, shape index: {}]
  %s3 = inlined_call_operand.hbm [shape: bf16[128,128], index: 3, kind: input, shape index: {}]
  %s4 = inlined_call_operand.vmem [shape: f32[1,128], index: 4, kind: input, shape index: {}]
  %s5 = inlined_call_operand.hbm [shape: bf16[2,128], index: 5, kind: output, shape index: {}]
  %s6 = sld [smem:[#allocation0]]
  $region42: #{tpu_custom_call.1} parent=0
    _
  %s8 = ssub.s32 1, %s6
  %s9 = scalar_select 0, %s8, %s6
  $region1: #{tpu_custom_call.1} parent=0
    #allocation2 [shape = 'u8[3584]{0}', space=vmem, size = 0x1000, scoped, tag = 'input window, operand 0, single buffered']
    #allocation3 [shape = 's32[1]{0}', space=sflag, size = 0x4, scoped, tag = 'scoped memory for tpu_custom_call.1']
    #allocation4 [shape = 's32[1]{0}', space=sflag, size = 0x4, scoped, tag = 'scoped memory for tpu_custom_call.1']
    #allocation5 [shape = 'u8[200704]{0}', space=vmem, size = 0x31000, scoped, tag = 'input window, operand 1, single buffered']
    #allocation6 [shape = 's32[1]{0}', space=sflag, size = 0x4, scoped, tag = 'scoped memory for tpu_custom_call.1']
    #allocation7 [shape = 'u8[32768]{0}', space=vmem, size = 0x8000, scoped, tag = 'input window, operand 3, single buffered']
    #allocation8 [shape = 'u8[512]{0}', space=vmem, size = 0x400, scoped, tag = 'output window, operand 0, single buffered']
    %10 = vsyncpa [#allocation3], 0
    %11 = vsyncpa [#allocation6], 0
    %12 = vsyncpa [#allocation4], 0
    // Predicated region
    $region2: #{tpu_custom_call.1} parent=1 // pred_check
      _
    $region3: #{tpu_custom_call.1} parent=1 // pred_check_branch
      %14 = sbr.rel (0) target = $region5
    $region4: #{tpu_custom_call.1} parent=1 // pred_region
      %s16 = ssub.s32 112, 112
      %17 = vsyncadd [#allocation3], %s16
      %s19 = sshll.u32 [#allocation2], 4
      %s20 = int_to_ptr.vmem [resolvable:$true] %s19
      %22 = dma.hbm_to_vmem [thread:$0]  %s0, 112, %s20, [#allocation3]
    $region5: #{tpu_custom_call.1} parent=1 // pred_fallthru
      _
    // Predicated region
    $region6: #{tpu_custom_call.1} parent=1 // pred_check
      _
    $region7: #{tpu_custom_call.1} parent=1 // pred_check_branch
      %24 = sbr.rel (0) target = $region9
    $region8: #{tpu_custom_call.1} parent=1 // pred_region
      %s26 = ssub.s32 6272, 6272
      %27 = vsyncadd [#allocation6], %s26
      %s28 = sshll.u32 [#allocation5], 4
      %s29 = int_to_ptr.vmem [resolvable:$true] %s28
      %34 = dma.hbm_to_vmem [thread:$0]  %s1, 6272, %s29, [#allocation6], 64, 64, 4
    $region9: #{tpu_custom_call.1} parent=1 // pred_fallthru
      _
    // Predicated region
    $region10: #{tpu_custom_call.1} parent=1 // pred_check
      _
    $region11: #{tpu_custom_call.1} parent=1 // pred_check_branch
      %36 = sbr.rel (0) target = $region13
    $region12: #{tpu_custom_call.1} parent=1 // pred_region
      _
    $region13: #{tpu_custom_call.1} parent=1 // pred_fallthru
      _
    // Predicated region
    $region14: #{tpu_custom_call.1} parent=1 // pred_check
      _
    $region15: #{tpu_custom_call.1} parent=1 // pred_check_branch
      %38 = sbr.rel (0) target = $region17
    $region16: #{tpu_custom_call.1} parent=1 // pred_region
      %s40 = ssub.s32 1024, 1024
      %41 = vsyncadd [#allocation6], %s40
      %s42 = sshll.u32 [#allocation7], 4
      %s43 = int_to_ptr.vmem [resolvable:$true] %s42
      %48 = dma.hbm_to_vmem [thread:$0]  %s3, 1024, %s43, [#allocation6], 64, 64, 4
    $region17: #{tpu_custom_call.1} parent=1 // pred_fallthru
      _
    // Predicated region
    $region18: #{tpu_custom_call.1} parent=1 // pred_check
      _
    $region19: #{tpu_custom_call.1} parent=1 // pred_check_branch
      %50 = sbr.rel (0) target = $region21
    $region20: #{tpu_custom_call.1} parent=1 // pred_region
      _
    $region21: #{tpu_custom_call.1} parent=1 // pred_fallthru
      _
    // Predicated region
    $region22: #{tpu_custom_call.1} parent=1 // pred_check
      _
    $region23: #{tpu_custom_call.1} parent=1 // pred_check_branch
      %52 = sbr.rel (0) target = $region25
    $region24: #{tpu_custom_call.1} parent=1 // pred_region
      %53 = dma.done [#allocation3], 112
    $region25: #{tpu_custom_call.1} parent=1 // pred_fallthru
      _
    // Predicated region
    $region26: #{tpu_custom_call.1} parent=1 // pred_check
      _
    $region27: #{tpu_custom_call.1} parent=1 // pred_check_branch
      %55 = sbr.rel (0) target = $region29
    $region28: #{tpu_custom_call.1} parent=1 // pred_region
      %56 = dma.done [#allocation6], 6272
    $region29: #{tpu_custom_call.1} parent=1 // pred_fallthru
      _
    // Predicated region
    $region30: #{tpu_custom_call.1} parent=1 // pred_check
      _
    $region31: #{tpu_custom_call.1} parent=1 // pred_check_branch
      %58 = sbr.rel (0) target = $region33
    $region32: #{tpu_custom_call.1} parent=1 // pred_region
      %59 = dma.done [#allocation6], 1024
    $region33: #{tpu_custom_call.1} parent=1 // pred_fallthru
      _
    %v61 = vld [vmem:[#allocation2] sm:$0x7f]
    %v62 = vld [vmem:[#allocation5] sm:$0xf]
    %v63 = vld [vmem:[#allocation5 + $0x4] sm:$0xf]
    %v64 = vld [vmem:[#allocation5 + $0x8] sm:$0xf]
    %v65 = vld [vmem:[#allocation5 + $0xc] sm:$0xf]
    %v66 = vld [vmem:[#allocation5 + $0x10] sm:$0xf]
    %v67 = vld [vmem:[#allocation5 + $0x14] sm:$0xf]
    %v68 = vld [vmem:[#allocation5 + $0x18] sm:$0xf]
    %v69 = vld [vmem:[#allocation5 + $0x1c] sm:$0xf]
    %v70 = vld [vmem:[#allocation5 + $0x20] sm:$0xf]
    %v71 = vld [vmem:[#allocation5 + $0x24] sm:$0xf]
    %v72 = vld [vmem:[#allocation5 + $0x28] sm:$0xf]
    %v73 = vld [vmem:[#allocation5 + $0x2c] sm:$0xf]
    %v74 = vld [vmem:[#allocation5 + $0x30] sm:$0xf]
    %v75 = vld [vmem:[#allocation5 + $0x34] sm:$0xf]
    %v76 = vld [vmem:[#allocation5 + $0x38] sm:$0xf]
    %v77 = vld [vmem:[#allocation5 + $0x3c] sm:$0xf]
    %v78 = vld [vmem:[#allocation5 + $0x40] sm:$0xf]
    %v79 = vld [vmem:[#allocation5 + $0x44] sm:$0xf]
    %v80 = vld [vmem:[#allocation5 + $0x48] sm:$0xf]
    %v81 = vld [vmem:[#allocation5 + $0x4c] sm:$0xf]
    %v82 = vld [vmem:[#allocation5 + $0x50] sm:$0xf]
    %v83 = vld [vmem:[#allocation5 + $0x54] sm:$0xf]
    %v84 = vld [vmem:[#allocation5 + $0x58] sm:$0xf]
    %v85 = vld [vmem:[#allocation5 + $0x5c] sm:$0xf]
    %v86 = vld [vmem:[#allocation5 + $0x60] sm:$0xf]
    %v87 = vld [vmem:[#allocation5 + $0x64] sm:$0xf]
    %v88 = vld [vmem:[#allocation5 + $0x68] sm:$0xf]
    %v89 = vld [vmem:[#allocation5 + $0x6c] sm:$0xf]
    %v90 = vld [vmem:[#allocation5 + $0x70] sm:$0xf]
    %v91 = vld [vmem:[#allocation5 + $0x74] sm:$0xf]
    %v92 = vld [vmem:[#allocation5 + $0x78] sm:$0xf]
    %v93 = vld [vmem:[#allocation5 + $0x7c] sm:$0xf]
    %v94 = vld [vmem:[#allocation5 + $0x80] sm:$0xf]
    %v95 = vld [vmem:[#allocation5 + $0x84] sm:$0xf]
    %v96 = vld [vmem:[#allocation5 + $0x88] sm:$0xf]
    %v97 = vld [vmem:[#allocation5 + $0x8c] sm:$0xf]
    %v98 = vld [vmem:[#allocation5 + $0x90] sm:$0xf]
    %v99 = vld [vmem:[#allocation5 + $0x94] sm:$0xf]
    %v100 = vld [vmem:[#allocation5 + $0x98] sm:$0xf]
    %v101 = vld [vmem:[#allocation5 + $0x9c] sm:$0xf]
    %v102 = vld [vmem:[#allocation5 + $0xa0] sm:$0xf]
    %v103 = vld [vmem:[#allocation5 + $0xa4] sm:$0xf]
    %v104 = vld [vmem:[#allocation5 + $0xa8] sm:$0xf]
    %v105 = vld [vmem:[#allocation5 + $0xac] sm:$0xf]
    %v106 = vld [vmem:[#allocation5 + $0xb0] sm:$0xf]
    %v107 = vld [vmem:[#allocation5 + $0xb4] sm:$0xf]
    %v108 = vld [vmem:[#allocation5 + $0xb8] sm:$0xf]
    %v109 = vld [vmem:[#allocation5 + $0xbc] sm:$0xf]
    %v110 = vld [vmem:[#allocation5 + $0xc0] sm:$0xf]
    %v111 = vld [vmem:[#allocation5 + $0xc4] sm:$0xf]
    %v112 = vld [vmem:[#allocation5 + $0xc8] sm:$0xf]
    %v113 = vld [vmem:[#allocation5 + $0xcc] sm:$0xf]
    %v114 = vld [vmem:[#allocation5 + $0xd0] sm:$0xf]
    %v115 = vld [vmem:[#allocation5 + $0xd4] sm:$0xf]
    %v116 = vld [vmem:[#allocation5 + $0xd8] sm:$0xf]
    %v117 = vld [vmem:[#allocation5 + $0xdc] sm:$0xf]
    %v118 = vld [vmem:[#allocation5 + $0xe0] sm:$0xf]
    %v119 = vld [vmem:[#allocation5 + $0xe4] sm:$0xf]
    %v120 = vld [vmem:[#allocation5 + $0xe8] sm:$0xf]
    %v121 = vld [vmem:[#allocation5 + $0xec] sm:$0xf]
    %v122 = vld [vmem:[#allocation5 + $0xf0] sm:$0xf]
    %v123 = vld [vmem:[#allocation5 + $0xf4] sm:$0xf]
    %v124 = vld [vmem:[#allocation5 + $0xf8] sm:$0xf]
    %v125 = vld [vmem:[#allocation5 + $0xfc] sm:$0xf]
    %v126 = vld [vmem:[#allocation5 + $0x100] sm:$0xf]
    %v127 = vld [vmem:[#allocation5 + $0x104] sm:$0xf]
    %v128 = vld [vmem:[#allocation5 + $0x108] sm:$0xf]
    %v129 = vld [vmem:[#allocation5 + $0x10c] sm:$0xf]
    %v130 = vld [vmem:[#allocation5 + $0x110] sm:$0xf]
    %v131 = vld [vmem:[#allocation5 + $0x114] sm:$0xf]
    %v132 = vld [vmem:[#allocation5 + $0x118] sm:$0xf]
    %v133 = vld [vmem:[#allocation5 + $0x11c] sm:$0xf]
    %v134 = vld [vmem:[#allocation5 + $0x120] sm:$0xf]
    %v135 = vld [vmem:[#allocation5 + $0x124] sm:$0xf]
    %v136 = vld [vmem:[#allocation5 + $0x128] sm:$0xf]
    %v137 = vld [vmem:[#allocation5 + $0x12c] sm:$0xf]
    %v138 = vld [vmem:[#allocation5 + $0x130] sm:$0xf]
    %v139 = vld [vmem:[#allocation5 + $0x134] sm:$0xf]
    %v140 = vld [vmem:[#allocation5 + $0x138] sm:$0xf]
    %v141 = vld [vmem:[#allocation5 + $0x13c] sm:$0xf]
    %v142 = vld [vmem:[#allocation5 + $0x140] sm:$0xf]
    %v143 = vld [vmem:[#allocation5 + $0x144] sm:$0xf]
    %v144 = vld [vmem:[#allocation5 + $0x148] sm:$0xf]
    %v145 = vld [vmem:[#allocation5 + $0x14c] sm:$0xf]
    %v146 = vld [vmem:[#allocation5 + $0x150] sm:$0xf]
    %v147 = vld [vmem:[#allocation5 + $0x154] sm:$0xf]
    %v148 = vld [vmem:[#allocation5 + $0x158] sm:$0xf]
    %v149 = vld [vmem:[#allocation5 + $0x15c] sm:$0xf]
    %v150 = vld [vmem:[#allocation5 + $0x160] sm:$0xf]
    %v151 = vld [vmem:[#allocation5 + $0x164] sm:$0xf]
    %v152 = vld [vmem:[#allocation5 + $0x168] sm:$0xf]
    %v153 = vld [vmem:[#allocation5 + $0x16c] sm:$0xf]
    %v154 = vld [vmem:[#allocation5 + $0x170] sm:$0xf]
    %v155 = vld [vmem:[#allocation5 + $0x174] sm:$0xf]
    %v156 = vld [vmem:[#allocation5 + $0x178] sm:$0xf]
    %v157 = vld [vmem:[#allocation5 + $0x17c] sm:$0xf]
    %v158 = vld [vmem:[#allocation5 + $0x180] sm:$0xf]
    %v159 = vld [vmem:[#allocation5 + $0x184] sm:$0xf]
    %v160 = vld [vmem:[%s2] sm:$0x1]
    %v162 = vlaneseq
    %v163 = vshrl.u32 %v162, 7
    %v164 = vsub.s32 0, %v163
    %v165 = vrot.slane %v160, %v164
    %v168 = vcombine.high %v61, %v61
    %v170 = vunpack.c.l.s4 1966171168
    %v171 = vunpack.c.0.s8 %v170
    %v172 = vlaneseq
    %v173 = vshrl.u32 %v172, 7
    %v174 = vsub.s32 %v171, %v173
    %v175 = vrot.slane %v61, %v174
    %v177 = vunpack.c.l.s4 1966171168
    %v178 = vunpack.c.0.s8 %v177
    %v179 = vlaneseq
    %v180 = vshrl.u32 %v179, 7
    %v181 = vsub.s32 %v178, %v180
    %v182 = vrot.slane %v168, %v181
    %v183 = vcombine.high %v175, %v175
    %v184 = vcombine.high %v182, %v182
    %v186 = vunpack.c.l.s4 1966171168
    %v187 = vunpack.c.0.s8 %v186
    %v188 = vlaneseq
    %v189 = vshrl.u32 %v188, 7
    %v190 = vsub.s32 %v187, %v189
    %v191 = vrot.slane %v175, %v190
    %v193 = vunpack.c.l.s4 1966171168
    %v194 = vunpack.c.0.s8 %v193
    %v195 = vlaneseq
    %v196 = vshrl.u32 %v195, 7
    %v197 = vsub.s32 %v194, %v196
    %v198 = vrot.slane %v182, %v197
    %v200 = vunpack.c.l.s4 1966171168
    %v201 = vunpack.c.0.s8 %v200
    %v202 = vlaneseq
    %v203 = vshrl.u32 %v202, 7
    %v204 = vsub.s32 %v201, %v203
    %v205 = vrot.slane %v183, %v204
    %v207 = vunpack.c.l.s4 1966171168
    %v208 = vunpack.c.0.s8 %v207
    %v209 = vlaneseq
    %v210 = vshrl.u32 %v209, 7
    %v211 = vsub.s32 %v208, %v210
    %v212 = vrot.slane %v184, %v211
    %v213 = vcombine.high %v191, %v191
    %v214 = vcombine.high %v198, %v198
    %v215 = vcombine.high %v205, %v205
    %v320 = vunpack.c.l.b16 %v62
    %v321 = vunpack.c.l.b16 %v63
    %v322 = vunpack.c.l.b16 %v64
    %v323 = vunpack.c.l.b16 %v65
    %v324 = vunpack.c.l.b16 %v66
    %v325 = vunpack.c.l.b16 %v67
    %v326 = vunpack.c.l.b16 %v68
    %v327 = vunpack.c.l.b16 %v69
    %v328 = vunpack.c.l.b16 %v70
    %v329 = vunpack.c.l.b16 %v71
    %v330 = vunpack.c.l.b16 %v72
    %v331 = vunpack.c.l.b16 %v73
    %v332 = vunpack.c.l.b16 %v74
    %v333 = vunpack.c.l.b16 %v75
    %v334 = vunpack.c.l.b16 %v76
    %v335 = vunpack.c.l.b16 %v77
    %v336 = vunpack.c.l.b16 %v78
    %v337 = vunpack.c.l.b16 %v79
    %v338 = vunpack.c.l.b16 %v80
    %v339 = vunpack.c.l.b16 %v81
    %v340 = vunpack.c.l.b16 %v82
    %v341 = vunpack.c.l.b16 %v83
    %v342 = vunpack.c.l.b16 %v84
    %v343 = vunpack.c.l.b16 %v85
    %v344 = vunpack.c.l.b16 %v86
    %v345 = vunpack.c.l.b16 %v87
    %v346 = vunpack.c.l.b16 %v88
    %v347 = vunpack.c.l.b16 %v89
    %v348 = vunpack.c.l.b16 %v90
    %v349 = vunpack.c.l.b16 %v91
    %v350 = vunpack.c.l.b16 %v92
    %v351 = vunpack.c.l.b16 %v93
    %v352 = vunpack.c.l.b16 %v94
    %v353 = vunpack.c.l.b16 %v95
    %v354 = vunpack.c.l.b16 %v96
    %v355 = vunpack.c.l.b16 %v97
    %v356 = vunpack.c.l.b16 %v98
    %v357 = vunpack.c.l.b16 %v99
    %v358 = vunpack.c.l.b16 %v100
    %v359 = vunpack.c.l.b16 %v101
    %v360 = vunpack.c.l.b16 %v102
    %v361 = vunpack.c.l.b16 %v103
    %v362 = vunpack.c.l.b16 %v104
    %v363 = vunpack.c.l.b16 %v105
    %v364 = vunpack.c.l.b16 %v106
    %v365 = vunpack.c.l.b16 %v107
    %v366 = vunpack.c.l.b16 %v108
    %v367 = vunpack.c.l.b16 %v109
    %v368 = vunpack.c.l.b16 %v110
    %v369 = vunpack.c.l.b16 %v111
    %v370 = vunpack.c.l.b16 %v112
    %v371 = vunpack.c.l.b16 %v113
    %v372 = vunpack.c.l.b16 %v114
    %v373 = vunpack.c.l.b16 %v115
    %v374 = vunpack.c.l.b16 %v116
    %v375 = vunpack.c.l.b16 %v117
    %v376 = vunpack.c.l.b16 %v118
    %v377 = vunpack.c.l.b16 %v119
    %v378 = vunpack.c.l.b16 %v120
    %v379 = vunpack.c.l.b16 %v121
    %v380 = vunpack.c.l.b16 %v122
    %v381 = vunpack.c.l.b16 %v123
    %v382 = vunpack.c.l.b16 %v124
    %v383 = vunpack.c.l.b16 %v125
    %v384 = vunpack.c.l.b16 %v126
    %v385 = vunpack.c.l.b16 %v127
    %v386 = vunpack.c.l.b16 %v128
    %v387 = vunpack.c.l.b16 %v129
    %v388 = vunpack.c.l.b16 %v130
    %v389 = vunpack.c.l.b16 %v131
    %v390 = vunpack.c.l.b16 %v132
    %v391 = vunpack.c.l.b16 %v133
    %v392 = vunpack.c.l.b16 %v134
    %v393 = vunpack.c.l.b16 %v135
    %v394 = vunpack.c.l.b16 %v136
    %v395 = vunpack.c.l.b16 %v137
    %v396 = vunpack.c.l.b16 %v138
    %v397 = vunpack.c.l.b16 %v139
    %v398 = vunpack.c.l.b16 %v140
    %v399 = vunpack.c.l.b16 %v141
    %v400 = vunpack.c.l.b16 %v142
    %v401 = vunpack.c.l.b16 %v143
    %v402 = vunpack.c.l.b16 %v144
    %v403 = vunpack.c.l.b16 %v145
    %v404 = vunpack.c.l.b16 %v146
    %v405 = vunpack.c.l.b16 %v147
    %v406 = vunpack.c.l.b16 %v148
    %v407 = vunpack.c.l.b16 %v149
    %v408 = vunpack.c.l.b16 %v150
    %v409 = vunpack.c.l.b16 %v151
    %v410 = vunpack.c.l.b16 %v152
    %v411 = vunpack.c.l.b16 %v153
    %v412 = vunpack.c.l.b16 %v154
    %v413 = vunpack.c.l.b16 %v155
    %v414 = vunpack.c.l.b16 %v156
    %v415 = vunpack.c.l.b16 %v157
    %v416 = vunpack.c.l.b16 %v158
    %v417 = vunpack.c.l.b16 %v159
    %v418 = vpack.c.b16 %v321, %v320
    %v419 = vpack.c.b16 %v323, %v322
    %v420 = vpack.c.b16 %v325, %v324
    %v421 = vpack.c.b16 %v327, %v326
    %v422 = vpack.c.b16 %v329, %v328
    %v423 = vpack.c.b16 %v331, %v330
    %v424 = vpack.c.b16 %v333, %v332
    %v425 = vpack.c.b16 %v335, %v334
    %v426 = vpack.c.b16 %v337, %v336
    %v427 = vpack.c.b16 %v339, %v338
    %v428 = vpack.c.b16 %v341, %v340
    %v429 = vpack.c.b16 %v343, %v342
    %v430 = vpack.c.b16 %v345, %v344
    %v431 = vpack.c.b16 %v347, %v346
    %v432 = vpack.c.b16 %v349, %v348
    %v433 = vpack.c.b16 %v351, %v350
    %v434 = vpack.c.b16 %v353, %v352
    %v435 = vpack.c.b16 %v355, %v354
    %v436 = vpack.c.b16 %v357, %v356
    %v437 = vpack.c.b16 %v359, %v358
    %v438 = vpack.c.b16 %v361, %v360
    %v439 = vpack.c.b16 %v363, %v362
    %v440 = vpack.c.b16 %v365, %v364
    %v441 = vpack.c.b16 %v367, %v366
    %v442 = vpack.c.b16 %v369, %v368
    %v443 = vpack.c.b16 %v371, %v370
    %v444 = vpack.c.b16 %v373, %v372
    %v445 = vpack.c.b16 %v375, %v374
    %v446 = vpack.c.b16 %v377, %v376
    %v447 = vpack.c.b16 %v379, %v378
    %v448 = vpack.c.b16 %v381, %v380
    %v449 = vpack.c.b16 %v383, %v382
    %v450 = vpack.c.b16 %v385, %v384
    %v451 = vpack.c.b16 %v387, %v386
    %v452 = vpack.c.b16 %v389, %v388
    %v453 = vpack.c.b16 %v391, %v390
    %v454 = vpack.c.b16 %v393, %v392
    %v455 = vpack.c.b16 %v395, %v394
    %v456 = vpack.c.b16 %v397, %v396
    %v457 = vpack.c.b16 %v399, %v398
    %v458 = vpack.c.b16 %v401, %v400
    %v459 = vpack.c.b16 %v403, %v402
    %v460 = vpack.c.b16 %v405, %v404
    %v461 = vpack.c.b16 %v407, %v406
    %v462 = vpack.c.b16 %v409, %v408
    %v463 = vpack.c.b16 %v411, %v410
    %v464 = vpack.c.b16 %v413, %v412
    %v465 = vpack.c.b16 %v415, %v414
    %v466 = vpack.c.b16 %v417, %v416
    %vm516 = vcmask 130048
    %v518 = vsel %vm516, %v214, 0
    %520 = vmatprep.subr.bf16.mxu0 0
    %521 = vmatpush1.bf16.msra.mxu0 %v425
    %522 = vmatprep.subr.bf16.mxu0 0
    %523 = vmatpush1.bf16.msra.mxu0 %v424
    %524 = vmatprep.subr.bf16.mxu0 0
    %525 = vmatpush1.bf16.msra.mxu0 %v423
    %526 = vmatprep.subr.bf16.mxu0 0
    %527 = vmatpush1.bf16.msra.mxu0 %v422
    %528 = vmatprep.subr.bf16.mxu0 0
    %529 = vmatpush1.bf16.msra.mxu0 %v421
    %530 = vmatprep.subr.bf16.mxu0 0
    %531 = vmatpush1.bf16.msra.mxu0 %v420
    %532 = vmatprep.subr.bf16.mxu0 0
    %533 = vmatpush1.bf16.msra.mxu0 %v419
    %534 = vmatprep.subr.bf16.mxu0 0
    %535 = vmatpush1.bf16.msra.mxu0 %v418
    %536 = vmatprep.subr.bf16.mxu0 0
    %537 = vmatpush2.bf16.msra.mxu0 %v433
    %538 = vmatprep.subr.bf16.mxu0 0
    %539 = vmatpush2.bf16.msra.mxu0 %v432
    %540 = vmatprep.subr.bf16.mxu0 0
    %541 = vmatpush2.bf16.msra.mxu0 %v431
    %542 = vmatprep.subr.bf16.mxu0 0
    %543 = vmatpush2.bf16.msra.mxu0 %v430
    %544 = vmatprep.subr.bf16.mxu0 0
    %545 = vmatpush2.bf16.msra.mxu0 %v429
    %546 = vmatprep.subr.bf16.mxu0 0
    %547 = vmatpush2.bf16.msra.mxu0 %v428
    %548 = vmatprep.subr.bf16.mxu0 0
    %549 = vmatpush2.bf16.msra.mxu0 %v427
    %550 = vmatprep.subr.bf16.mxu0 0
    %551 = vmatpush2.bf16.msra.mxu0 %v426
    %552 = vmatprep.mubr.bf16.mxu0 %v205
    %553 = vmatmul.mubr.bf16.gmra.mxu0 %v191
    %v554 = vpop.f32.mrf.mxu0
    %v555 = vadd.f32 %v165, %v554
    %v556 = vpop.f32.mrf.mxu0
    %v557 = vpop.f32.mrf.mxu0
    %v558 = vpop.f32.mrf.mxu0
    %559 = vdwg.mxu0
    %560 = vmatprep.subr.bf16.mxu0 0
    %561 = vmatpush1.bf16.msra.mxu0 %v441
    %562 = vmatprep.subr.bf16.mxu0 0
    %563 = vmatpush1.bf16.msra.mxu0 %v440
    %564 = vmatprep.subr.bf16.mxu0 0
    %565 = vmatpush1.bf16.msra.mxu0 %v439
    %566 = vmatprep.subr.bf16.mxu0 0
    %567 = vmatpush1.bf16.msra.mxu0 %v438
    %568 = vmatprep.subr.bf16.mxu0 0
    %569 = vmatpush1.bf16.msra.mxu0 %v437
    %570 = vmatprep.subr.bf16.mxu0 0
    %571 = vmatpush1.bf16.msra.mxu0 %v436
    %572 = vmatprep.subr.bf16.mxu0 0
    %573 = vmatpush1.bf16.msra.mxu0 %v435
    %574 = vmatprep.subr.bf16.mxu0 0
    %575 = vmatpush1.bf16.msra.mxu0 %v434
    %576 = vmatprep.subr.bf16.mxu0 0
    %577 = vmatpush2.bf16.msra.mxu0 %v449
    %578 = vmatprep.subr.bf16.mxu0 0
    %579 = vmatpush2.bf16.msra.mxu0 %v448
    %580 = vmatprep.subr.bf16.mxu0 0
    %581 = vmatpush2.bf16.msra.mxu0 %v447
    %582 = vmatprep.subr.bf16.mxu0 0
    %583 = vmatpush2.bf16.msra.mxu0 %v446
    %584 = vmatprep.subr.bf16.mxu0 0
    %585 = vmatpush2.bf16.msra.mxu0 %v445
    %586 = vmatprep.subr.bf16.mxu0 0
    %587 = vmatpush2.bf16.msra.mxu0 %v444
    %588 = vmatprep.subr.bf16.mxu0 0
    %589 = vmatpush2.bf16.msra.mxu0 %v443
    %590 = vmatprep.subr.bf16.mxu0 0
    %591 = vmatpush2.bf16.msra.mxu0 %v442
    %592 = vmatprep.mubr.bf16.mxu0 %v215
    %593 = vmatmul.mubr.bf16.gmra.mxu0 %v213
    %v594 = vpop.f32.mrf.mxu0
    %v595 = vadd.f32 %v555, %v594
    %v596 = vpop.f32.mrf.mxu0
    %v597 = vpop.f32.mrf.mxu0
    %v598 = vpop.f32.mrf.mxu0
    %599 = vdwg.mxu0
    %600 = vmatprep.subr.bf16.mxu0 0
    %601 = vmatpush1.bf16.msra.mxu0 %v457
    %602 = vmatprep.subr.bf16.mxu0 0
    %603 = vmatpush1.bf16.msra.mxu0 %v456
    %604 = vmatprep.subr.bf16.mxu0 0
    %605 = vmatpush1.bf16.msra.mxu0 %v455
    %606 = vmatprep.subr.bf16.mxu0 0
    %607 = vmatpush1.bf16.msra.mxu0 %v454
    %608 = vmatprep.subr.bf16.mxu0 0
    %609 = vmatpush1.bf16.msra.mxu0 %v453
    %610 = vmatprep.subr.bf16.mxu0 0
    %611 = vmatpush1.bf16.msra.mxu0 %v452
    %612 = vmatprep.subr.bf16.mxu0 0
    %613 = vmatpush1.bf16.msra.mxu0 %v451
    %614 = vmatprep.subr.bf16.mxu0 0
    %615 = vmatpush1.bf16.msra.mxu0 %v450
    %616 = vmatprep.subr.bf16.mxu0 0
    %617 = vmatpush2.bf16.msra.mxu0 %v465
    %618 = vmatprep.subr.bf16.mxu0 0
    %619 = vmatpush2.bf16.msra.mxu0 %v464
    %620 = vmatprep.subr.bf16.mxu0 0
    %621 = vmatpush2.bf16.msra.mxu0 %v463
    %622 = vmatprep.subr.bf16.mxu0 0
    %623 = vmatpush2.bf16.msra.mxu0 %v462
    %624 = vmatprep.subr.bf16.mxu0 0
    %625 = vmatpush2.bf16.msra.mxu0 %v461
    %626 = vmatprep.subr.bf16.mxu0 0
    %627 = vmatpush2.bf16.msra.mxu0 %v460
    %628 = vmatprep.subr.bf16.mxu0 0
    %629 = vmatpush2.bf16.msra.mxu0 %v459
    %630 = vmatprep.subr.bf16.mxu0 0
    %631 = vmatpush2.bf16.msra.mxu0 %v458
    %632 = vmatprep.mubr.bf16.mxu0 %v212
    %633 = vmatmul.mubr.bf16.gmra.mxu0 %v198
    %v634 = vpop.f32.mrf.mxu0
    %v635 = vadd.f32 %v595, %v634
    %v636 = vpop.f32.mrf.mxu0
    %v637 = vpop.f32.mrf.mxu0
    %v638 = vpop.f32.mrf.mxu0
    %639 = vdwg.mxu0
    %640 = vmatprep.subr.bf16.mxu0 0
    %641 = vmatpush1.bf16.msra.mxu0 0
    %642 = vmatprep.subr.bf16.mxu0 0
    %643 = vmatpush1.bf16.msra.mxu0 0
    %644 = vmatprep.subr.bf16.mxu0 0
    %645 = vmatpush1.bf16.msra.mxu0 0
    %646 = vmatprep.subr.bf16.mxu0 0
    %647 = vmatpush1.bf16.msra.mxu0 0
    %648 = vmatprep.subr.bf16.mxu0 0
    %649 = vmatpush1.bf16.msra.mxu0 0
    %650 = vmatprep.subr.bf16.mxu0 0
    %651 = vmatpush1.bf16.msra.mxu0 0
    %652 = vmatprep.subr.bf16.mxu0 0
    %653 = vmatpush1.bf16.msra.mxu0 0
    %654 = vmatprep.subr.bf16.mxu0 0
    %655 = vmatpush1.bf16.msra.mxu0 %v466
    %656 = vmatprep.subr.bf16.mxu0 0
    %657 = vmatpush2.bf16.msra.mxu0 0
    %658 = vmatprep.subr.bf16.mxu0 0
    %659 = vmatpush2.bf16.msra.mxu0 0
    %660 = vmatprep.subr.bf16.mxu0 0
    %661 = vmatpush2.bf16.msra.mxu0 0
    %662 = vmatprep.subr.bf16.mxu0 0
    %663 = vmatpush2.bf16.msra.mxu0 0
    %664 = vmatprep.subr.bf16.mxu0 0
    %665 = vmatpush2.bf16.msra.mxu0 0
    %666 = vmatprep.subr.bf16.mxu0 0
    %667 = vmatpush2.bf16.msra.mxu0 0
    %668 = vmatprep.subr.bf16.mxu0 0
    %669 = vmatpush2.bf16.msra.mxu0 0
    %670 = vmatprep.subr.bf16.mxu0 0
    %671 = vmatpush2.bf16.msra.mxu0 0
    %672 = vmatprep.mubr.bf16.mxu0 0
    %673 = vmatmul.mubr.bf16.gmra.mxu0 %v518
    %v674 = vpop.f32.mrf.mxu0
    %v675 = vadd.f32 %v635, %v674
    %v676 = vpop.f32.mrf.mxu0
    %v677 = vpop.f32.mrf.mxu0
    %v678 = vpop.f32.mrf.mxu0
    %679 = vdwg.mxu0
    %v680 = vmax.f32 %v675, 0.0
    %v681 = vpack.c.bf16 %v680, %v680
    %v682 = vld [vmem:[#allocation7] sm:$0xf]
    %v683 = vld [vmem:[#allocation7 + $0x4] sm:$0xf]
    %v684 = vld [vmem:[#allocation7 + $0x8] sm:$0xf]
    %v685 = vld [vmem:[#allocation7 + $0xc] sm:$0xf]
    %v686 = vld [vmem:[#allocation7 + $0x10] sm:$0xf]
    %v687 = vld [vmem:[#allocation7 + $0x14] sm:$0xf]
    %v688 = vld [vmem:[#allocation7 + $0x18] sm:$0xf]
    %v689 = vld [vmem:[#allocation7 + $0x1c] sm:$0xf]
    %v690 = vld [vmem:[#allocation7 + $0x20] sm:$0xf]
    %v691 = vld [vmem:[#allocation7 + $0x24] sm:$0xf]
    %v692 = vld [vmem:[#allocation7 + $0x28] sm:$0xf]
    %v693 = vld [vmem:[#allocation7 + $0x2c] sm:$0xf]
    %v694 = vld [vmem:[#allocation7 + $0x30] sm:$0xf]
    %v695 = vld [vmem:[#allocation7 + $0x34] sm:$0xf]
    %v696 = vld [vmem:[#allocation7 + $0x38] sm:$0xf]
    %v697 = vld [vmem:[#allocation7 + $0x3c] sm:$0xf]
    %v698 = vld [vmem:[%s4] sm:$0x1]
    %v700 = vlaneseq
    %v701 = vshrl.u32 %v700, 7
    %v702 = vsub.s32 0, %v701
    %v703 = vrot.slane %v698, %v702
    %v721 = vunpack.c.l.b16 %v682
    %v722 = vunpack.c.l.b16 %v683
    %v723 = vunpack.c.l.b16 %v684
    %v724 = vunpack.c.l.b16 %v685
    %v725 = vunpack.c.l.b16 %v686
    %v726 = vunpack.c.l.b16 %v687
    %v727 = vunpack.c.l.b16 %v688
    %v728 = vunpack.c.l.b16 %v689
    %v729 = vunpack.c.l.b16 %v690
    %v730 = vunpack.c.l.b16 %v691
    %v731 = vunpack.c.l.b16 %v692
    %v732 = vunpack.c.l.b16 %v693
    %v733 = vunpack.c.l.b16 %v694
    %v734 = vunpack.c.l.b16 %v695
    %v735 = vunpack.c.l.b16 %v696
    %v736 = vunpack.c.l.b16 %v697
    %v737 = vpack.c.b16 %v722, %v721
    %v738 = vpack.c.b16 %v724, %v723
    %v739 = vpack.c.b16 %v726, %v725
    %v740 = vpack.c.b16 %v728, %v727
    %v741 = vpack.c.b16 %v730, %v729
    %v742 = vpack.c.b16 %v732, %v731
    %v743 = vpack.c.b16 %v734, %v733
    %v744 = vpack.c.b16 %v736, %v735
    %753 = vmatprep.subr.bf16.mxu0 0
    %754 = vmatpush1.bf16.msra.mxu0 %v744
    %755 = vmatprep.subr.bf16.mxu0 0
    %756 = vmatpush1.bf16.msra.mxu0 %v743
    %757 = vmatprep.subr.bf16.mxu0 0
    %758 = vmatpush1.bf16.msra.mxu0 %v742
    %759 = vmatprep.subr.bf16.mxu0 0
    %760 = vmatpush1.bf16.msra.mxu0 %v741
    %761 = vmatprep.subr.bf16.mxu0 0
    %762 = vmatpush1.bf16.msra.mxu0 %v740
    %763 = vmatprep.subr.bf16.mxu0 0
    %764 = vmatpush1.bf16.msra.mxu0 %v739
    %765 = vmatprep.subr.bf16.mxu0 0
    %766 = vmatpush1.bf16.msra.mxu0 %v738
    %767 = vmatprep.subr.bf16.mxu0 0
    %768 = vmatpush1.bf16.msra.mxu0 %v737
    %769 = vmatprep.subr.bf16.mxu0 0
    %770 = vmatpush2.bf16.msra.mxu0 0
    %771 = vmatprep.subr.bf16.mxu0 0
    %772 = vmatpush2.bf16.msra.mxu0 0
    %773 = vmatprep.subr.bf16.mxu0 0
    %774 = vmatpush2.bf16.msra.mxu0 0
    %775 = vmatprep.subr.bf16.mxu0 0
    %776 = vmatpush2.bf16.msra.mxu0 0
    %777 = vmatprep.subr.bf16.mxu0 0
    %778 = vmatpush2.bf16.msra.mxu0 0
    %779 = vmatprep.subr.bf16.mxu0 0
    %780 = vmatpush2.bf16.msra.mxu0 0
    %781 = vmatprep.subr.bf16.mxu0 0
    %782 = vmatpush2.bf16.msra.mxu0 0
    %783 = vmatprep.subr.bf16.mxu0 0
    %784 = vmatpush2.bf16.msra.mxu0 0
    %785 = vmatprep.mubr.bf16.mxu0 0
    %786 = vmatmul.mubr.bf16.gmra.mxu0 %v681
    %v787 = vpop.f32.mrf.mxu0
    %v788 = vadd.f32 %v703, %v787
    %v789 = vpop.f32.mrf.mxu0
    %v790 = vpop.f32.mrf.mxu0
    %v791 = vpop.f32.mrf.mxu0
    %792 = vdwg.mxu0
    %v793 = vpack.c.bf16 %v788, %v788
    %794 = vst [vmem:[#allocation8] sm:$0x1] %v793
    // Predicated region
    $region34: #{tpu_custom_call.1} parent=1 // pred_check
      _
    $region35: #{tpu_custom_call.1} parent=1 // pred_check_branch
      %796 = sbr.rel (0) target = $region37
    $region36: #{tpu_custom_call.1} parent=1 // pred_region
      %s798 = ssub.s32 16, 16
      %799 = vsyncadd [#allocation4], %s798
      %s801 = sshll.u32 [#allocation8], 4
      %s802 = int_to_ptr.vmem [resolvable:$true] %s801
      %804 = dma.vmem_to_hbm [thread:$0]  %s802, 16, %s5, [#allocation4]
    $region37: #{tpu_custom_call.1} parent=1 // pred_fallthru
      _
    // Predicated region
    $region38: #{tpu_custom_call.1} parent=1 // pred_check
      _
    $region39: #{tpu_custom_call.1} parent=1 // pred_check_branch
      %806 = sbr.rel (0) target = $region41
    $region40: #{tpu_custom_call.1} parent=1 // pred_region
      %807 = dma.done [#allocation4], 16
    $region41: #{tpu_custom_call.1} parent=1 // pred_fallthru
      _
    %808 = vsyncpa [#allocation3], 1
    %809 = vsyncpa [#allocation6], 1
    %810 = vsyncpa [#allocation4], 1

</llo_original>
